<compile_context>
chip_gen: v7x
topology: tpu7x:2x2x1
jax: 0.10.0
libtpu: 0.0.40
codegen_flags: <defaults>
</compile_context>

<pallas_src>
import functools

import jax
import jax.numpy as jnp
import numpy as np
from jax.experimental import pallas as pl
from jax.experimental.pallas import tpu as pltpu

ATOM_SIZE = 51
ATOM_PAD = 128          # per-action atom slab padded to one full lane group
V_MAX = 10.0
V_MIN = -10.0
HIDDEN = 512


def _round_up(x, m):
    return (x + m - 1) // m * m


# ----------------------------- Pallas kernels ------------------------------ #

def _matmul_bias_relu_kernel(x_ref, w_ref, b_ref, o_ref, *, relu):
    """One M-tile of y = relu(x @ w + b). x/w are bf16, accumulation is f32."""
    y = jnp.dot(x_ref[...], w_ref[...], preferred_element_type=jnp.float32)
    y = y + b_ref[...]
    if relu:
        y = jnp.maximum(y, 0.0)
    o_ref[...] = y.astype(o_ref.dtype)


def _pallas_matmul(x, w, b, *, relu=True, tm=512, out_dtype=jnp.bfloat16):
    """y = relu(x @ w + b), gridded (software-pipelined) over rows of x.

    w's lane dim must already be a multiple of 128 (caller pads).  No host-side
    row padding: when M <= tm a single full-extent block is used, otherwise the
    ragged last tile is handled by Pallas's masked boundary blocks."""
    M, K = x.shape
    Kw, O = w.shape
    assert Kw == K and O % 128 == 0
    tm_eff = M if M <= tm else tm
    grid = pl.cdiv(M, tm_eff)
    kern = functools.partial(_matmul_bias_relu_kernel, relu=relu)
    return pl.pallas_call(
        kern,
        out_shape=jax.ShapeDtypeStruct((M, O), out_dtype),
        grid=(grid,),
        in_specs=[
            pl.BlockSpec((tm_eff, K), lambda i: (i, 0)),   # streaming row tile
            pl.BlockSpec((K, O), lambda i: (0, 0)),        # resident weight
            pl.BlockSpec((1, O), lambda i: (0, 0)),        # resident bias row
        ],
        out_specs=pl.BlockSpec((tm_eff, O), lambda i: (i, 0)),
        compiler_params=pltpu.CompilerParams(
            dimension_semantics=("parallel",)),
    )(x, w, b.reshape(1, O))


def _head_kernel(f_ref, w1_ref, b1_ref, wv2_ref, bv2_ref, wa2_ref, ba2_ref,
                 mask_ref, sup_ref, q_ref, dist_ref, *, n_actions):
    """Fused dueling head for one batch tile: fused value+advantage first layer
    (bf16 MXU), f32 second layers, dueling combine, masked softmax over
    128-padded atom slabs, clamp(0.001), and E[dist*support] as one f32 matmul
    against a block-diagonal support matrix (lane-dense (TB, 128) output)."""
    f = f_ref[...]                                                     # bf16

    # Fused first layers of the value and advantage streams: (TB, 2*HIDDEN).
    h = jnp.dot(f, w1_ref[...], preferred_element_type=jnp.float32) + b1_ref[...]
    h = jnp.maximum(h, 0.0)
    hv = h[:, :HIDDEN]
    ha = h[:, HIDDEN:]

    # Second layers kept in f32 for accuracy (small matmuls).
    value = jnp.dot(hv, wv2_ref[...], preferred_element_type=jnp.float32) + bv2_ref[...]
    adv = jnp.dot(ha, wa2_ref[...], preferred_element_type=jnp.float32) + ba2_ref[...]

    # Mean over actions using 128-aligned atom slabs: lane-aligned vreg selects.
    adv_mean = adv[:, :ATOM_PAD]
    for a in range(1, n_actions):
        adv_mean = adv_mean + adv[:, a * ATOM_PAD:(a + 1) * ATOM_PAD]
    adv_mean = adv_mean * (1.0 / n_actions)

    # mask sends the 77 padded atom lanes to -1e30 so they vanish from the
    # softmax.  NOTE: their clamped dist value (0.001) is only harmless because
    # sup_ref has all-zero rows for pad lanes (coupling documented on purpose).
    base = value - adv_mean + mask_ref[...]

    for a in range(n_actions):
        qa = base + adv[:, a * ATOM_PAD:(a + 1) * ATOM_PAD]            # (TB, 128)
        m = jnp.max(qa, axis=-1, keepdims=True)
        e = jnp.exp(qa - m)
        s = jnp.sum(e, axis=-1, keepdims=True)
        inv = pl.reciprocal(s, approx=True)                            # EUP slot
        dist_ref[:, a * ATOM_PAD:(a + 1) * ATOM_PAD] = jnp.maximum(e * inv, 0.001)

    # Block-diagonal support matrix -> q for all actions in one f32 MXU matmul,
    # written as a lane-dense (TB, 128) slab (sliced to n_actions outside).
    q_ref[...] = jnp.dot(dist_ref[...], sup_ref[...],
                         preferred_element_type=jnp.float32)


def _pallas_head(feature, head_p, n_actions, *, tb=128):
    B, K = feature.shape
    tb_eff = B if B <= tb else tb
    grid = pl.cdiv(B, tb_eff)
    na_pad = n_actions * ATOM_PAD
    w1h, b1h, wv2p, bv2p, wa2p, ba2p, mask, sup = head_p
    kern = functools.partial(_head_kernel, n_actions=n_actions)
    q = pl.pallas_call(
        kern,
        out_shape=jax.ShapeDtypeStruct((B, ATOM_PAD), jnp.float32),
        grid=(grid,),
        in_specs=[
            pl.BlockSpec((tb_eff, K), lambda i: (i, 0)),               # feature tile streams
            pl.BlockSpec((K, 2 * HIDDEN), lambda i: (0, 0)),           # resident weights
            pl.BlockSpec((1, 2 * HIDDEN), lambda i: (0, 0)),
            pl.BlockSpec((HIDDEN, ATOM_PAD), lambda i: (0, 0)),
            pl.BlockSpec((1, ATOM_PAD), lambda i: (0, 0)),
            pl.BlockSpec((HIDDEN, na_pad), lambda i: (0, 0)),
            pl.BlockSpec((1, na_pad), lambda i: (0, 0)),
            pl.BlockSpec((1, ATOM_PAD), lambda i: (0, 0)),
            pl.BlockSpec((na_pad, ATOM_PAD), lambda i: (0, 0)),
        ],
        out_specs=pl.BlockSpec((tb_eff, ATOM_PAD), lambda i: (i, 0)),
        scratch_shapes=[pltpu.VMEM((tb_eff, na_pad), jnp.float32)],    # dist slab
        compiler_params=pltpu.CompilerParams(
            dimension_semantics=("parallel",)),
    )(feature, w1h, b1h, wv2p, bv2p, wa2p, ba2p, mask, sup)
    return q[:, :n_actions]


# ------------------------------- JAX glue ---------------------------------- #

def _im2col_nhwc(x, kh, kw, stride):
    """x: (B, H, W, C) -> (B*Ho*Wo, kh*kw*C); K-order is (i, j, c), c fastest."""
    B, H, W, C = x.shape
    Ho = (H - kh) // stride + 1
    Wo = (W - kw) // stride + 1
    cols = []
    for i in range(kh):
        for j in range(kw):
            cols.append(x[:, i:i + stride * (Ho - 1) + 1:stride,
                             j:j + stride * (Wo - 1) + 1:stride, :])   # (B, Ho, Wo, C)
    patches = jnp.stack(cols, axis=3)                                  # (B, Ho, Wo, kh*kw, C)
    return patches.reshape(B * Ho * Wo, kh * kw * C), (B, Ho, Wo)


def _conv_relu_nhwc(x_nhwc, layer, *, tm=512):
    wm, bp, (kh, kw, stride, out_c) = layer
    patches, (B, Ho, Wo) = _im2col_nhwc(x_nhwc, kh, kw, stride)        # bf16 patches
    y = _pallas_matmul(patches, wm, bp, relu=True, tm=tm)              # (B*Ho*Wo, 128-pad O) bf16
    return y.reshape(B, Ho, Wo, -1)[..., :out_c]                       # drop padded channels


# --------------------------- parameter preparation -------------------------- #

def prepare_params(params, n_actions, input_shape):
    """Convert PyTorch-convention parameters into padded, kernel-ready tensors."""
    (w1, b1), (w2, b2), (w3, b3), head = params

    def prep_conv(w, b, stride, scale=1.0):
        O, C, kh, kw = w.shape
        # (O, C, kh, kw) -> (kh*kw*C, O) matching the NHWC im2col K-order.
        wm = jnp.transpose(w, (2, 3, 1, 0)).reshape(kh * kw * C, O) * scale
        Op = _round_up(O, 128)
        wm = jnp.pad(wm, ((0, 0), (0, Op - O)))
        bp = jnp.pad(b, (0, Op - O))
        return wm.astype(jnp.bfloat16), bp.astype(jnp.float32), (kh, kw, stride, O)

    conv1 = prep_conv(w1, b1, 4, scale=1.0 / 255.0)   # fold the x/255 into conv1
    conv2 = prep_conv(w2, b2, 2)
    conv3 = prep_conv(w3, b3, 1)

    # Conv output spatial dims (needed to reorder head rows NCHW-flat -> NHWC-flat).
    def out_dim(n, k, s):
        return (n - k) // s + 1
    _, H, W = input_shape
    H1, W1 = out_dim(H, 8, 4), out_dim(W, 8, 4)
    H2, W2 = out_dim(H1, 4, 2), out_dim(W1, 4, 2)
    H3, W3 = out_dim(H2, 3, 1), out_dim(W2, 3, 1)
    C3 = w3.shape[0]

    (wv1, bv1), (wv2, bv2), (wa1, ba1), (wa2, ba2) = head   # weights stored (in, out)

    def nchw_rows_to_nhwc(w_in_out):
        return (w_in_out.reshape(C3, H3, W3, -1)
                .transpose(1, 2, 0, 3)
                .reshape(C3 * H3 * W3, -1))

    # Fuse value/advantage first layers into one bf16 matmul (shared input feature).
    w1h = jnp.concatenate([nchw_rows_to_nhwc(wv1), nchw_rows_to_nhwc(wa1)], axis=1)
    b1h = jnp.concatenate([bv1, ba1]).reshape(1, 2 * HIDDEN)

    pad_a = ATOM_PAD - ATOM_SIZE
    wv2p = jnp.pad(wv2, ((0, 0), (0, pad_a)))
    bv2p = jnp.pad(bv2, (0, pad_a)).reshape(1, ATOM_PAD)
    wa2p = jnp.pad(wa2.reshape(HIDDEN, n_actions, ATOM_SIZE),
                   ((0, 0), (0, 0), (0, pad_a))).reshape(HIDDEN, n_actions * ATOM_PAD)
    ba2p = jnp.pad(ba2.reshape(n_actions, ATOM_SIZE),
                   ((0, 0), (0, pad_a))).reshape(1, n_actions * ATOM_PAD)

    # Additive mask: 0 on the 51 real atom lanes, -1e30 on padded lanes.
    mask = np.where(np.arange(ATOM_PAD) < ATOM_SIZE, 0.0, -1e30).astype(np.float32)
    mask = jnp.asarray(mask).reshape(1, ATOM_PAD)

    # Block-diagonal support matrix: column a carries action a's 51 support atoms.
    # Pad-lane rows are all-zero; this neutralizes the 0.001 clamp on pad lanes.
    support = np.linspace(V_MIN, V_MAX, ATOM_SIZE, dtype=np.float32)
    S = np.zeros((n_actions * ATOM_PAD, ATOM_PAD), dtype=np.float32)
    for a in range(n_actions):
        S[a * ATOM_PAD:a * ATOM_PAD + ATOM_SIZE, a] = support
    S = jnp.asarray(S)

    head_p = (w1h.astype(jnp.bfloat16), b1h.astype(jnp.float32),
              wv2p.astype(jnp.float32), bv2p.astype(jnp.float32),
              wa2p.astype(jnp.float32), ba2p.astype(jnp.float32),
              mask, S)
    return conv1, conv2, conv3, head_p


# ------------------------------ full forward -------------------------------- #

def rainbow_dqn_forward(x_nchw, prep, n_actions):
    """x: (B, C, H, W) float32 -> q: (B, n_actions)."""
    conv1, conv2, conv3, head_p = prep
    h = jnp.transpose(x_nchw, (0, 2, 3, 1)).astype(jnp.bfloat16)  # NCHW->NHWC, bf16 once
    h = _conv_relu_nhwc(h, conv1, tm=1024)    # long grid: big row tiles amortize overhead
    h = _conv_relu_nhwc(h, conv2, tm=256)     # smaller tiles -> even grid split on v7x
    h = _conv_relu_nhwc(h, conv3, tm=256)
    B = h.shape[0]
    feature = h.reshape(B, -1)                # NHWC flatten (head rows reordered to match)
    return _pallas_head(feature, head_p, n_actions)


# ------------------------- pure-JAX reference path -------------------------- #

def _ref_conv_relu(x, w, b, stride):
    O, C, kh, kw = w.shape
    B, _, H, W = x.shape
    Ho = (H - kh) // stride + 1
    Wo = (W - kw) // stride + 1
    cols = []
    for i in range(kh):
        for j in range(kw):
            cols.append(x[:, :, i:i + stride * (Ho - 1) + 1:stride,
                               j:j + stride * (Wo - 1) + 1:stride])
    patches = jnp.stack(cols, axis=2)                         # (B, C, kh*kw, Ho, Wo)
    patches = patches.transpose(0, 3, 4, 1, 2).reshape(B * Ho * Wo, C * kh * kw)
    y = jnp.maximum(patches @ w.reshape(O, C * kh * kw).T + b[None, :], 0.0)
    return y.reshape(B, Ho, Wo, O).transpose(0, 3, 1, 2)      # NCHW, like PyTorch


def rainbow_dqn_reference(x, params, n_actions):
    (w1, b1), (w2, b2), (w3, b3), head = params
    h = _ref_conv_relu(x / 255.0, w1, b1, 4)
    h = _ref_conv_relu(h, w2, b2, 2)
    h = _ref_conv_relu(h, w3, b3, 1)
    B = h.shape[0]
    feature = h.reshape(B, -1)                                # NCHW flatten (PyTorch)

    (wv1, bv1), (wv2, bv2), (wa1, ba1), (wa2, ba2) = head
    hv = jnp.maximum(feature @ wv1 + bv1, 0.0)
    value = (hv @ wv2 + bv2).reshape(B, 1, ATOM_SIZE)
    ha = jnp.maximum(feature @ wa1 + ba1, 0.0)
    adv = (ha @ wa2 + ba2).reshape(B, n_actions, ATOM_SIZE)
    q_atoms = value + adv - adv.mean(axis=1, keepdims=True)
    dist = jnp.maximum(jax.nn.softmax(q_atoms, axis=2), 0.001)
    support = jnp.linspace(V_MIN, V_MAX, ATOM_SIZE).astype(jnp.float32)
    return jnp.sum(dist * support, axis=2)


# --------------------------- parameter construction ------------------------- #

def _conv_params(key, out_c, in_c, kh, kw):
    k1, k2 = jax.random.split(key)
    bound = 1.0 / np.sqrt(in_c * kh * kw)
    w = jax.random.uniform(k1, (out_c, in_c, kh, kw), minval=-bound, maxval=bound)
    b = jax.random.uniform(k2, (out_c,), minval=-bound, maxval=bound)
    return w.astype(jnp.float32), b.astype(jnp.float32)


def _noisy_linear_params(key, in_f, out_f, sigma_init=0.017):
    """Effective NoisyLinear weight/bias: mu + sigma * factorized_epsilon."""
    k1, k2, k3, k4 = jax.random.split(key, 4)
    mu_range = 1.0 / np.sqrt(in_f)
    w_mu = jax.random.uniform(k1, (out_f, in_f), minval=-mu_range, maxval=mu_range)
    b_mu = jax.random.uniform(k2, (out_f,), minval=-mu_range, maxval=mu_range)

    def scale_noise(k, n):
        e = jax.random.normal(k, (n,))
        return jnp.sign(e) * jnp.sqrt(jnp.abs(e))

    eps_in = scale_noise(k3, in_f)
    eps_out = scale_noise(k4, out_f)
    w = w_mu + sigma_init * jnp.outer(eps_out, eps_in)
    b = b_mu + sigma_init * eps_out
    # transpose to (in, out) for the x @ W convention inside the kernels
    return w.T.astype(jnp.float32), b.astype(jnp.float32)


# ---------------------------------- main ------------------------------------ #

if __name__ == "__main__":
    key = jax.random.PRNGKey(0)
    k_x, k_c1, k_c2, k_c3, k_v1, k_v2, k_a1, k_a2 = jax.random.split(key, 8)

    # smallest shapes valid for the 8/4/3 (stride 4/2/1) conv stack: 36 -> 8 -> 3 -> 1
    batch, n_actions = 2, 6
    input_shape = (4, 36, 36)
    n_linear = 64 * 1 * 1

    x = jax.random.uniform(k_x, (batch,) + input_shape, minval=0.0, maxval=255.0,
                           dtype=jnp.float32)

    params = (
        _conv_params(k_c1, 32, input_shape[0], 8, 8),
        _conv_params(k_c2, 64, 32, 4, 4),
        _conv_params(k_c3, 64, 64, 3, 3),
        (
            _noisy_linear_params(k_v1, n_linear, HIDDEN),
            _noisy_linear_params(k_v2, HIDDEN, ATOM_SIZE),
            _noisy_linear_params(k_a1, n_linear, HIDDEN),
            _noisy_linear_params(k_a2, HIDDEN, n_actions * ATOM_SIZE),
        ),
    )

    prep = prepare_params(params, n_actions, input_shape)
    q = rainbow_dqn_forward(x, prep, n_actions)
    q = jax.block_until_ready(q)

    q_ref = rainbow_dqn_reference(x, params, n_actions)
    # Tolerance relaxed vs. the all-f32 version: matmul operands are now bf16
    # (f32 accumulation); the f32 reference differs by ~1e-3 in q.
    np.testing.assert_allclose(np.asarray(q), np.asarray(q_ref), rtol=2e-2, atol=2e-2)

    assert q.shape == (batch, n_actions)
    print("KERNEL_OK")
</pallas_src>

<mosaic_0001>
module attributes {stable_mosaic.version = 11 : i64} {
  func.func @_matmul_bias_relu_kernel(%arg0: i32, %arg1: memref<128x256xbf16, #tpu.memory_space<vmem>>, %arg2: memref<256x128xbf16, #tpu.memory_space<vmem>>, %arg3: memref<1x128xf32, #tpu.memory_space<vmem>>, %arg4: memref<128x128xbf16, #tpu.memory_space<vmem>>) attributes {dimension_semantics = [#tpu.dimension_semantics<parallel>], iteration_bounds = array<i64: 1>, scalar_prefetch = 0 : i64, scratch_operands = 0 : i64, tpu.core_type = #tpu.core_type<tc>, window_params = [{transform_indices = @transform_0, window_bounds = array<i64: 128, 256>}, {pipeline_mode = #tpu.pipeline_mode<synchronous>, transform_indices = @transform_1, window_bounds = array<i64: 256, 128>}, {pipeline_mode = #tpu.pipeline_mode<synchronous>, transform_indices = @transform_2, window_bounds = array<i64: 1, 128>}, {transform_indices = @transform_3, window_bounds = array<i64: 128, 128>}]} {
    %c0 = arith.constant 0 : index
    %c0_0 = arith.constant 0 : index
    %0 = vector.load %arg1[%c0, %c0_0] : memref<128x256xbf16, #tpu.memory_space<vmem>>, vector<128x256xbf16>
    %c0_1 = arith.constant 0 : index
    %c0_2 = arith.constant 0 : index
    %1 = vector.load %arg2[%c0_1, %c0_2] : memref<256x128xbf16, #tpu.memory_space<vmem>>, vector<256x128xbf16>
    %cst = arith.constant dense<0.000000e+00> : vector<128x128xf32>
    %2 = tpu.matmul %0, %1, %cst {dimension_numbers = #tpu.dot_dimension_numbers<[1], [0], [0], [1], [0, 0, 1, 1], [], []>} : vector<128x256xbf16>, vector<256x128xbf16>, vector<128x128xf32> -> vector<128x128xf32>
    %c0_3 = arith.constant 0 : index
    %c0_4 = arith.constant 0 : index
    %3 = vector.load %arg3[%c0_3, %c0_4] : memref<1x128xf32, #tpu.memory_space<vmem>>, vector<1x128xf32>
    %4 = vector.broadcast %3 : vector<1x128xf32> to vector<128x128xf32>
    %5 = arith.addf %2, %4 : vector<128x128xf32>
    %cst_5 = arith.constant 0.000000e+00 : f32
    %6 = vector.broadcast %cst_5 : f32 to vector<128x128xf32>
    %7 = arith.maximumf %5, %6 : vector<128x128xf32>
    %8 = arith.truncf %7 : vector<128x128xf32> to vector<128x128xbf16>
    %c0_6 = arith.constant 0 : index
    %c0_7 = arith.constant 0 : index
    %9 = vector.load %arg4[%c0_6, %c0_7] : memref<128x128xbf16, #tpu.memory_space<vmem>>, vector<128x128xbf16>
    tpu.vector_store %arg4[%c0_6, %c0_7], %8 {strides = array<i32>} : memref<128x128xbf16, #tpu.memory_space<vmem>>, vector<128x128xbf16>,
    return
  }
  func.func @transform_0(%arg0: i32) -> (i32, i32) {
    %c0_i32 = arith.constant 0 : i32
    %c0_i32_0 = arith.constant 0 : i32
    return %arg0, %c0_i32 : i32, i32
  }
  func.func @transform_1(%arg0: i32) -> (i32, i32) {
    %c0_i32 = arith.constant 0 : i32
    %c0_i32_0 = arith.constant 0 : i32
    %c0_i32_1 = arith.constant 0 : i32
    return %c0_i32, %c0_i32_0 : i32, i32
  }
  func.func @transform_2(%arg0: i32) -> (i32, i32) {
    %c0_i32 = arith.constant 0 : i32
    %c0_i32_0 = arith.constant 0 : i32
    %c0_i32_1 = arith.constant 0 : i32
    return %c0_i32, %c0_i32_0 : i32, i32
  }
  func.func @transform_3(%arg0: i32) -> (i32, i32) {
    %c0_i32 = arith.constant 0 : i32
    %c0_i32_0 = arith.constant 0 : i32
    return %arg0, %c0_i32 : i32, i32
  }
}

</mosaic_0001>

<llo_original>
// kernel: tpu_custom_call.1
$region0: #{tpu_custom_call.1}
  #allocation0 [shape = 'u32[]', space=smem, size = 0x4, offset = 0x4, fixed_abs, tag = 'smem constant byte address 0x4 - core index']
  #allocation1 [shape = 'u32[144,128]{1,0:T(1,128)}', space=vmem, size = 0x12000, scoped, tag = 'internal scratch']
  %s0 = inlined_call_operand.hbm [shape: bf16[128,256], index: 0, kind: input, shape index: {}]
  %s1 = inlined_call_operand.hbm [shape: bf16[256,128], index: 1, kind: input, shape index: {}]
  %s2 = inlined_call_operand.vmem [shape: f32[1,128], index: 2, kind: input, shape index: {}]
  %s3 = inlined_call_operand.hbm [shape: bf16[128,128], index: 3, kind: output, shape index: {}]
  %s4 = sld [smem:[#allocation0]]
  $region30: #{tpu_custom_call.1} parent=0
    _
  %s6 = ssub.s32 1, %s4
  %s7 = scalar_select 0, %s6, %s4
  $region1: #{tpu_custom_call.1} parent=0
    #allocation2 [shape = 'u8[65536]{0}', space=vmem, size = 0x10000, scoped, tag = 'input window, operand 0, single buffered']
    #allocation3 [shape = 's32[1]{0}', space=sflag, size = 0x4, scoped, tag = 'scoped memory for tpu_custom_call.1']
    #allocation4 [shape = 's32[1]{0}', space=sflag, size = 0x4, scoped, tag = 'scoped memory for tpu_custom_call.1']
    #allocation5 [shape = 'u8[65536]{0}', space=vmem, size = 0x10000, scoped, tag = 'input window, operand 1, single buffered']
    #allocation6 [shape = 's32[1]{0}', space=sflag, size = 0x4, scoped, tag = 'scoped memory for tpu_custom_call.1']
    #allocation7 [shape = 'u8[32768]{0}', space=vmem, size = 0x8000, scoped, tag = 'output window, operand 0, single buffered']
    %8 = vsyncpa [#allocation3], 0
    %9 = vsyncpa [#allocation6], 0
    %10 = vsyncpa [#allocation4], 0
    // Predicated region
    $region2: #{tpu_custom_call.1} parent=1 // pred_check
      _
    $region3: #{tpu_custom_call.1} parent=1 // pred_check_branch
      %12 = sbr.rel (0) target = $region5
    $region4: #{tpu_custom_call.1} parent=1 // pred_region
      %s14 = ssub.s32 2048, 2048
      %15 = vsyncadd [#allocation3], %s14
      %s16 = sshll.u32 [#allocation2], 4
      %s17 = int_to_ptr.vmem [resolvable:$true] %s16
      %22 = dma.hbm_to_vmem [thread:$0]  %s0, 2048, %s17, [#allocation3], 128, 128, 8
    $region5: #{tpu_custom_call.1} parent=1 // pred_fallthru
      _
    // Predicated region
    $region6: #{tpu_custom_call.1} parent=1 // pred_check
      _
    $region7: #{tpu_custom_call.1} parent=1 // pred_check_branch
      %24 = sbr.rel (0) target = $region9
    $region8: #{tpu_custom_call.1} parent=1 // pred_region
      %s26 = ssub.s32 2048, 2048
      %27 = vsyncadd [#allocation6], %s26
      %s28 = sshll.u32 [#allocation5], 4
      %s29 = int_to_ptr.vmem [resolvable:$true] %s28
      %34 = dma.hbm_to_vmem [thread:$0]  %s1, 2048, %s29, [#allocation6], 64, 64, 4
    $region9: #{tpu_custom_call.1} parent=1 // pred_fallthru
      _
    // Predicated region
    $region10: #{tpu_custom_call.1} parent=1 // pred_check
      _
    $region11: #{tpu_custom_call.1} parent=1 // pred_check_branch
      %36 = sbr.rel (0) target = $region13
    $region12: #{tpu_custom_call.1} parent=1 // pred_region
      _
    $region13: #{tpu_custom_call.1} parent=1 // pred_fallthru
      _
    // Predicated region
    $region14: #{tpu_custom_call.1} parent=1 // pred_check
      _
    $region15: #{tpu_custom_call.1} parent=1 // pred_check_branch
      %38 = sbr.rel (0) target = $region17
    $region16: #{tpu_custom_call.1} parent=1 // pred_region
      %39 = dma.done [#allocation3], 2048
    $region17: #{tpu_custom_call.1} parent=1 // pred_fallthru
      _
    // Predicated region
    $region18: #{tpu_custom_call.1} parent=1 // pred_check
      _
    $region19: #{tpu_custom_call.1} parent=1 // pred_check_branch
      %41 = sbr.rel (0) target = $region21
    $region20: #{tpu_custom_call.1} parent=1 // pred_region
      %42 = dma.done [#allocation6], 2048
    $region21: #{tpu_custom_call.1} parent=1 // pred_fallthru
      _
    %v44 = vld [vmem:[#allocation2] sm:$0xff]
    %v45 = vld [vmem:[#allocation2 + $0x8] sm:$0xff]
    %v46 = vld [vmem:[#allocation2 + $0x10] sm:$0xff]
    %v47 = vld [vmem:[#allocation2 + $0x18] sm:$0xff]
    %v48 = vld [vmem:[#allocation2 + $0x20] sm:$0xff]
    %v49 = vld [vmem:[#allocation2 + $0x28] sm:$0xff]
    %v50 = vld [vmem:[#allocation2 + $0x30] sm:$0xff]
    %v51 = vld [vmem:[#allocation2 + $0x38] sm:$0xff]
    %v52 = vld [vmem:[#allocation2 + $0x40] sm:$0xff]
    %v53 = vld [vmem:[#allocation2 + $0x48] sm:$0xff]
    %v54 = vld [vmem:[#allocation2 + $0x50] sm:$0xff]
    %v55 = vld [vmem:[#allocation2 + $0x58] sm:$0xff]
    %v56 = vld [vmem:[#allocation2 + $0x60] sm:$0xff]
    %v57 = vld [vmem:[#allocation2 + $0x68] sm:$0xff]
    %v58 = vld [vmem:[#allocation2 + $0x70] sm:$0xff]
    %v59 = vld [vmem:[#allocation2 + $0x78] sm:$0xff]
    %v60 = vld [vmem:[#allocation5] sm:$0xf]
    %v61 = vld [vmem:[#allocation5 + $0x4] sm:$0xf]
    %v62 = vld [vmem:[#allocation5 + $0x8] sm:$0xf]
    %v63 = vld [vmem:[#allocation5 + $0xc] sm:$0xf]
    %v64 = vld [vmem:[#allocation5 + $0x10] sm:$0xf]
    %v65 = vld [vmem:[#allocation5 + $0x14] sm:$0xf]
    %v66 = vld [vmem:[#allocation5 + $0x18] sm:$0xf]
    %v67 = vld [vmem:[#allocation5 + $0x1c] sm:$0xf]
    %v68 = vld [vmem:[#allocation5 + $0x20] sm:$0xf]
    %v69 = vld [vmem:[#allocation5 + $0x24] sm:$0xf]
    %v70 = vld [vmem:[#allocation5 + $0x28] sm:$0xf]
    %v71 = vld [vmem:[#allocation5 + $0x2c] sm:$0xf]
    %v72 = vld [vmem:[#allocation5 + $0x30] sm:$0xf]
    %v73 = vld [vmem:[#allocation5 + $0x34] sm:$0xf]
    %v74 = vld [vmem:[#allocation5 + $0x38] sm:$0xf]
    %v75 = vld [vmem:[#allocation5 + $0x3c] sm:$0xf]
    %v76 = vld [vmem:[#allocation5 + $0x40] sm:$0xf]
    %v77 = vld [vmem:[#allocation5 + $0x44] sm:$0xf]
    %v78 = vld [vmem:[#allocation5 + $0x48] sm:$0xf]
    %v79 = vld [vmem:[#allocation5 + $0x4c] sm:$0xf]
    %v80 = vld [vmem:[#allocation5 + $0x50] sm:$0xf]
    %v81 = vld [vmem:[#allocation5 + $0x54] sm:$0xf]
    %v82 = vld [vmem:[#allocation5 + $0x58] sm:$0xf]
    %v83 = vld [vmem:[#allocation5 + $0x5c] sm:$0xf]
    %v84 = vld [vmem:[#allocation5 + $0x60] sm:$0xf]
    %v85 = vld [vmem:[#allocation5 + $0x64] sm:$0xf]
    %v86 = vld [vmem:[#allocation5 + $0x68] sm:$0xf]
    %v87 = vld [vmem:[#allocation5 + $0x6c] sm:$0xf]
    %v88 = vld [vmem:[#allocation5 + $0x70] sm:$0xf]
    %v89 = vld [vmem:[#allocation5 + $0x74] sm:$0xf]
    %v90 = vld [vmem:[#allocation5 + $0x78] sm:$0xf]
    %v91 = vld [vmem:[#allocation5 + $0x7c] sm:$0xf]
    %v92 = vld [vmem:[%s2] sm:$0x1]
    %v94 = vlaneseq
    %v95 = vshrl.u32 %v94, 7
    %v96 = vsub.s32 0, %v95
    %v97 = vrot.slane %v92, %v96
    %v115 = vunpack.c.l.b16 %v44
    %v116 = vunpack.c.h.b16 %v44
    %v117 = vunpack.c.l.b16 %v45
    %v118 = vunpack.c.h.b16 %v45
    %v119 = vunpack.c.l.b16 %v46
    %v120 = vunpack.c.h.b16 %v46
    %v121 = vunpack.c.l.b16 %v47
    %v122 = vunpack.c.h.b16 %v47
    %v123 = vunpack.c.l.b16 %v48
    %v124 = vunpack.c.h.b16 %v48
    %v125 = vunpack.c.l.b16 %v49
    %v126 = vunpack.c.h.b16 %v49
    %v127 = vunpack.c.l.b16 %v50
    %v128 = vunpack.c.h.b16 %v50
    %v129 = vunpack.c.l.b16 %v51
    %v130 = vunpack.c.h.b16 %v51
    %v131 = vunpack.c.l.b16 %v52
    %v132 = vunpack.c.h.b16 %v52
    %v133 = vunpack.c.l.b16 %v53
    %v134 = vunpack.c.h.b16 %v53
    %v135 = vunpack.c.l.b16 %v54
    %v136 = vunpack.c.h.b16 %v54
    %v137 = vunpack.c.l.b16 %v55
    %v138 = vunpack.c.h.b16 %v55
    %v139 = vunpack.c.l.b16 %v56
    %v140 = vunpack.c.h.b16 %v56
    %v141 = vunpack.c.l.b16 %v57
    %v142 = vunpack.c.h.b16 %v57
    %v143 = vunpack.c.l.b16 %v58
    %v144 = vunpack.c.h.b16 %v58
    %v145 = vunpack.c.l.b16 %v59
    %v146 = vunpack.c.h.b16 %v59
    %v147 = vpack.c.b16 %v117, %v115
    %v148 = vpack.c.b16 %v118, %v116
    %v149 = vpack.c.b16 %v121, %v119
    %v150 = vpack.c.b16 %v122, %v120
    %v151 = vpack.c.b16 %v125, %v123
    %v152 = vpack.c.b16 %v126, %v124
    %v153 = vpack.c.b16 %v129, %v127
    %v154 = vpack.c.b16 %v130, %v128
    %v155 = vpack.c.b16 %v133, %v131
    %v156 = vpack.c.b16 %v134, %v132
    %v157 = vpack.c.b16 %v137, %v135
    %v158 = vpack.c.b16 %v138, %v136
    %v159 = vpack.c.b16 %v141, %v139
    %v160 = vpack.c.b16 %v142, %v140
    %v161 = vpack.c.b16 %v145, %v143
    %v162 = vpack.c.b16 %v146, %v144
    %v211 = vunpack.c.l.b16 %v60
    %v212 = vunpack.c.l.b16 %v61
    %v213 = vunpack.c.l.b16 %v62
    %v214 = vunpack.c.l.b16 %v63
    %v215 = vunpack.c.l.b16 %v64
    %v216 = vunpack.c.l.b16 %v65
    %v217 = vunpack.c.l.b16 %v66
    %v218 = vunpack.c.l.b16 %v67
    %v219 = vunpack.c.l.b16 %v68
    %v220 = vunpack.c.l.b16 %v69
    %v221 = vunpack.c.l.b16 %v70
    %v222 = vunpack.c.l.b16 %v71
    %v223 = vunpack.c.l.b16 %v72
    %v224 = vunpack.c.l.b16 %v73
    %v225 = vunpack.c.l.b16 %v74
    %v226 = vunpack.c.l.b16 %v75
    %v227 = vunpack.c.l.b16 %v76
    %v228 = vunpack.c.l.b16 %v77
    %v229 = vunpack.c.l.b16 %v78
    %v230 = vunpack.c.l.b16 %v79
    %v231 = vunpack.c.l.b16 %v80
    %v232 = vunpack.c.l.b16 %v81
    %v233 = vunpack.c.l.b16 %v82
    %v234 = vunpack.c.l.b16 %v83
    %v235 = vunpack.c.l.b16 %v84
    %v236 = vunpack.c.l.b16 %v85
    %v237 = vunpack.c.l.b16 %v86
    %v238 = vunpack.c.l.b16 %v87
    %v239 = vunpack.c.l.b16 %v88
    %v240 = vunpack.c.l.b16 %v89
    %v241 = vunpack.c.l.b16 %v90
    %v242 = vunpack.c.l.b16 %v91
    %v243 = vpack.c.b16 %v212, %v211
    %v244 = vpack.c.b16 %v214, %v213
    %v245 = vpack.c.b16 %v216, %v215
    %v246 = vpack.c.b16 %v218, %v217
    %v247 = vpack.c.b16 %v220, %v219
    %v248 = vpack.c.b16 %v222, %v221
    %v249 = vpack.c.b16 %v224, %v223
    %v250 = vpack.c.b16 %v226, %v225
    %v251 = vpack.c.b16 %v228, %v227
    %v252 = vpack.c.b16 %v230, %v229
    %v253 = vpack.c.b16 %v232, %v231
    %v254 = vpack.c.b16 %v234, %v233
    %v255 = vpack.c.b16 %v236, %v235
    %v256 = vpack.c.b16 %v238, %v237
    %v257 = vpack.c.b16 %v240, %v239
    %v258 = vpack.c.b16 %v242, %v241
    %275 = vmatprep.subr.bf16.mxu0 0
    %276 = vmatpush1.bf16.msra.mxu0 %v243
    %277 = vmatprep.subr.bf16.mxu0 0
    %278 = vmatpush1.bf16.msra.mxu0 %v244
    %279 = vmatprep.subr.bf16.mxu0 0
    %280 = vmatpush1.bf16.msra.mxu0 %v245
    %281 = vmatprep.subr.bf16.mxu0 0
    %282 = vmatpush1.bf16.msra.mxu0 %v246
    %283 = vmatprep.subr.bf16.mxu0 0
    %284 = vmatpush1.bf16.msra.mxu0 %v247
    %285 = vmatprep.subr.bf16.mxu0 0
    %286 = vmatpush1.bf16.msra.mxu0 %v248
    %287 = vmatprep.subr.bf16.mxu0 0
    %288 = vmatpush1.bf16.msra.mxu0 %v249
    %289 = vmatprep.subr.bf16.mxu0 0
    %290 = vmatpush1.bf16.msra.mxu0 %v250
    %291 = vmatprep.subr.bf16.mxu0 0
    %292 = vmatpush1.bf16.msra.mxu0 %v251
    %293 = vmatprep.subr.bf16.mxu0 0
    %294 = vmatpush1.bf16.msra.mxu0 %v252
    %295 = vmatprep.subr.bf16.mxu0 0
    %296 = vmatpush1.bf16.msra.mxu0 %v253
    %297 = vmatprep.subr.bf16.mxu0 0
    %298 = vmatpush1.bf16.msra.mxu0 %v254
    %299 = vmatprep.subr.bf16.mxu0 0
    %300 = vmatpush1.bf16.msra.mxu0 %v255
    %301 = vmatprep.subr.bf16.mxu0 0
    %302 = vmatpush1.bf16.msra.mxu0 %v256
    %303 = vmatprep.subr.bf16.mxu0 0
    %304 = vmatpush1.bf16.msra.mxu0 %v257
    %305 = vmatprep.subr.bf16.mxu0 0
    %306 = vmatpush1.bf16.msra.mxu0 %v258
    %307 = vmatprep.mubr.bf16.mxu0 %v148
    %308 = vmatmul.mubr.bf16.gmra.mrb[0].mxu0 %v147
    %v309 = vpop.f32.mrb[0].mxu0
    %v310 = vadd.f32 %v97, %v309
    %v311 = vpop.f32.mrb[0].mxu0
    %v312 = vpop.f32.mrb[0].mxu0
    %v313 = vadd.f32 %v97, %v312
    %v314 = vpop.f32.mrb[0].mxu0
    %315 = vmatprep.mubr.bf16.mxu0 %v150
    %316 = vmatmul.mubr.bf16.gmra.mrb[0].mxu0 %v149
    %v317 = vpop.f32.mrb[0].mxu0
    %v318 = vadd.f32 %v97, %v317
    %v319 = vpop.f32.mrb[0].mxu0
    %v320 = vpop.f32.mrb[0].mxu0
    %v321 = vadd.f32 %v97, %v320
    %v322 = vpop.f32.mrb[0].mxu0
    %323 = vmatprep.mubr.bf16.mxu0 %v152
    %324 = vmatmul.mubr.bf16.gmra.mrb[0].mxu0 %v151
    %v325 = vpop.f32.mrb[0].mxu0
    %v326 = vadd.f32 %v97, %v325
    %v327 = vpop.f32.mrb[0].mxu0
    %v328 = vpop.f32.mrb[0].mxu0
    %v329 = vadd.f32 %v97, %v328
    %v330 = vpop.f32.mrb[0].mxu0
    %331 = vmatprep.mubr.bf16.mxu0 %v154
    %332 = vmatmul.mubr.bf16.gmra.mrb[0].mxu0 %v153
    %v333 = vpop.f32.mrb[0].mxu0
    %v334 = vadd.f32 %v97, %v333
    %v335 = vpop.f32.mrb[0].mxu0
    %v336 = vpop.f32.mrb[0].mxu0
    %v337 = vadd.f32 %v97, %v336
    %v338 = vpop.f32.mrb[0].mxu0
    %339 = vmatprep.mubr.bf16.mxu0 %v156
    %340 = vmatmul.mubr.bf16.gmra.mrb[0].mxu0 %v155
    %v341 = vpop.f32.mrb[0].mxu0
    %v342 = vadd.f32 %v97, %v341
    %v343 = vpop.f32.mrb[0].mxu0
    %v344 = vpop.f32.mrb[0].mxu0
    %v345 = vadd.f32 %v97, %v344
    %v346 = vpop.f32.mrb[0].mxu0
    %347 = vmatprep.mubr.bf16.mxu0 %v158
    %348 = vmatmul.mubr.bf16.gmra.mrb[0].mxu0 %v157
    %v349 = vpop.f32.mrb[0].mxu0
    %v350 = vadd.f32 %v97, %v349
    %v351 = vpop.f32.mrb[0].mxu0
    %v352 = vpop.f32.mrb[0].mxu0
    %v353 = vadd.f32 %v97, %v352
    %v354 = vpop.f32.mrb[0].mxu0
    %355 = vmatprep.mubr.bf16.mxu0 %v160
    %356 = vmatmul.mubr.bf16.gmra.mrb[0].mxu0 %v159
    %v357 = vpop.f32.mrb[0].mxu0
    %v358 = vadd.f32 %v97, %v357
    %v359 = vpop.f32.mrb[0].mxu0
    %v360 = vpop.f32.mrb[0].mxu0
    %v361 = vadd.f32 %v97, %v360
    %v362 = vpop.f32.mrb[0].mxu0
    %363 = vmatprep.mubr.bf16.mxu0 %v162
    %364 = vmatmul.mubr.bf16.gmra.mrb[0].mxu0 %v161
    %v365 = vpop.f32.mrb[0].mxu0
    %v366 = vadd.f32 %v97, %v365
    %v367 = vpop.f32.mrb[0].mxu0
    %v368 = vpop.f32.mrb[0].mxu0
    %v369 = vadd.f32 %v97, %v368
    %v370 = vpop.f32.mrb[0].mxu0
    %371 = vdwg.mxu0
    %v372 = vmax.f32 %v310, 0.0
    %v373 = vmax.f32 %v313, 0.0
    %v374 = vmax.f32 %v318, 0.0
    %v375 = vmax.f32 %v321, 0.0
    %v376 = vmax.f32 %v326, 0.0
    %v377 = vmax.f32 %v329, 0.0
    %v378 = vmax.f32 %v334, 0.0
    %v379 = vmax.f32 %v337, 0.0
    %v380 = vmax.f32 %v342, 0.0
    %v381 = vmax.f32 %v345, 0.0
    %v382 = vmax.f32 %v350, 0.0
    %v383 = vmax.f32 %v353, 0.0
    %v384 = vmax.f32 %v358, 0.0
    %v385 = vmax.f32 %v361, 0.0
    %v386 = vmax.f32 %v366, 0.0
    %v387 = vmax.f32 %v369, 0.0
    %v388 = vpack.c.bf16 %v373, %v372
    %v389 = vpack.c.bf16 %v375, %v374
    %v390 = vpack.c.bf16 %v377, %v376
    %v391 = vpack.c.bf16 %v379, %v378
    %v392 = vpack.c.bf16 %v381, %v380
    %v393 = vpack.c.bf16 %v383, %v382
    %v394 = vpack.c.bf16 %v385, %v384
    %v395 = vpack.c.bf16 %v387, %v386
    %v404 = vunpack.c.l.b16 %v388
    %v405 = vunpack.c.h.b16 %v388
    %v406 = vunpack.c.l.b16 %v389
    %v407 = vunpack.c.h.b16 %v389
    %v408 = vunpack.c.l.b16 %v390
    %v409 = vunpack.c.h.b16 %v390
    %v410 = vunpack.c.l.b16 %v391
    %v411 = vunpack.c.h.b16 %v391
    %v412 = vunpack.c.l.b16 %v392
    %v413 = vunpack.c.h.b16 %v392
    %v414 = vunpack.c.l.b16 %v393
    %v415 = vunpack.c.h.b16 %v393
    %v416 = vunpack.c.l.b16 %v394
    %v417 = vunpack.c.h.b16 %v394
    %v418 = vunpack.c.l.b16 %v395
    %v419 = vunpack.c.h.b16 %v395
    %v420 = vpack.c.b16 %v404, %v404
    %v421 = vpack.c.b16 %v405, %v405
    %v422 = vpack.c.b16 %v406, %v406
    %v423 = vpack.c.b16 %v407, %v407
    %v424 = vpack.c.b16 %v408, %v408
    %v425 = vpack.c.b16 %v409, %v409
    %v426 = vpack.c.b16 %v410, %v410
    %v427 = vpack.c.b16 %v411, %v411
    %v428 = vpack.c.b16 %v412, %v412
    %v429 = vpack.c.b16 %v413, %v413
    %v430 = vpack.c.b16 %v414, %v414
    %v431 = vpack.c.b16 %v415, %v415
    %v432 = vpack.c.b16 %v416, %v416
    %v433 = vpack.c.b16 %v417, %v417
    %v434 = vpack.c.b16 %v418, %v418
    %v435 = vpack.c.b16 %v419, %v419
    %452 = vst [vmem:[#allocation7] sm:$0xf] %v420
    %453 = vst [vmem:[#allocation7 + $0x4] sm:$0xf] %v421
    %454 = vst [vmem:[#allocation7 + $0x8] sm:$0xf] %v422
    %455 = vst [vmem:[#allocation7 + $0xc] sm:$0xf] %v423
    %456 = vst [vmem:[#allocation7 + $0x10] sm:$0xf] %v424
    %457 = vst [vmem:[#allocation7 + $0x14] sm:$0xf] %v425
    %458 = vst [vmem:[#allocation7 + $0x18] sm:$0xf] %v426
    %459 = vst [vmem:[#allocation7 + $0x1c] sm:$0xf] %v427
    %460 = vst [vmem:[#allocation7 + $0x20] sm:$0xf] %v428
    %461 = vst [vmem:[#allocation7 + $0x24] sm:$0xf] %v429
    %462 = vst [vmem:[#allocation7 + $0x28] sm:$0xf] %v430
    %463 = vst [vmem:[#allocation7 + $0x2c] sm:$0xf] %v431
    %464 = vst [vmem:[#allocation7 + $0x30] sm:$0xf] %v432
    %465 = vst [vmem:[#allocation7 + $0x34] sm:$0xf] %v433
    %466 = vst [vmem:[#allocation7 + $0x38] sm:$0xf] %v434
    %467 = vst [vmem:[#allocation7 + $0x3c] sm:$0xf] %v435
    // Predicated region
    $region22: #{tpu_custom_call.1} parent=1 // pred_check
      _
    $region23: #{tpu_custom_call.1} parent=1 // pred_check_branch
      %469 = sbr.rel (0) target = $region25
    $region24: #{tpu_custom_call.1} parent=1 // pred_region
      %s471 = ssub.s32 1024, 1024
      %472 = vsyncadd [#allocation4], %s471
      %s473 = sshll.u32 [#allocation7], 4
      %s474 = int_to_ptr.vmem [resolvable:$true] %s473
      %479 = dma.vmem_to_hbm [thread:$0]  %s474, 1024, %s3, [#allocation4], 64, 64, 4
    $region25: #{tpu_custom_call.1} parent=1 // pred_fallthru
      _
    // Predicated region
    $region26: #{tpu_custom_call.1} parent=1 // pred_check
      _
    $region27: #{tpu_custom_call.1} parent=1 // pred_check_branch
      %481 = sbr.rel (0) target = $region29
    $region28: #{tpu_custom_call.1} parent=1 // pred_region
      %482 = dma.done [#allocation4], 1024
    $region29: #{tpu_custom_call.1} parent=1 // pred_fallthru
      _
    %483 = vsyncpa [#allocation3], 1
    %484 = vsyncpa [#allocation6], 1
    %485 = vsyncpa [#allocation4], 1

</llo_original>
